<compile_context>
chip_gen: v7x
topology: tpu7x:2x2x1
jax: 0.10.0
libtpu: 0.0.40
codegen_flags: <defaults>
</compile_context>

<pallas_src>
import functools

import jax
import jax.numpy as jnp
from jax import lax
from jax.experimental import pallas as pl
from jax.experimental.pallas import tpu as pltpu


def _round_up(x, m):
    return (x + m - 1) // m * m


def _pick_tile(s_pad, want):
    """Largest multiple of 8 that divides s_pad and is <= want."""
    best = 8
    for t in range(8, min(s_pad, max(want, 8)) + 1, 8):
        if s_pad % t == 0:
            best = t
    return best


def _bert_embeddings_kernel(wid_ref,              # (T_pad,) int32, SMEM (scalar prefetch)
                            tid_ref,              # (tile, 1) int32
                            pos_ref,              # (tile, H_pad) f32
                            ttab_ref,             # (Vt, H_pad) f32
                            gamma_ref, beta_ref,  # (1, H_pad) f32
                            wtab_ref,             # (V, H_pad) f32, HBM (pl.ANY)
                            out_ref,              # (tile, H_pad) f32
                            wbuf, sem,            # scratch: VMEM (tile, H_pad), DMA sem (1,)
                            *, hidden, eps):
    tile = out_ref.shape[0]
    base = pl.program_id(0) * tile

    # --- word-embedding gather: per-row async DMAs from the HBM table ----------
    def _issue(j, carry):
        row = wid_ref[base + j]
        pltpu.make_async_copy(wtab_ref.at[pl.ds(row, 1)],
                              wbuf.at[pl.ds(j, 1)],
                              sem.at[0]).start()
        return carry

    lax.fori_loop(0, tile, _issue, 0)

    def _wait(j, carry):
        # Same-sized descriptor (dummy src index); consumes exactly one row-copy's
        # worth of the shared semaphore.
        pltpu.make_async_copy(wtab_ref.at[pl.ds(0, 1)],
                              wbuf.at[pl.ds(j, 1)],
                              sem.at[0]).wait()
        return carry

    lax.fori_loop(0, tile, _wait, 0)

    # --- token-type embedding: tiny vocab -> VPU selects ------------------------
    tids = tid_ref[...]                      # (tile, 1) int32
    ttab = ttab_ref[...]                     # (Vt, H_pad) f32
    type_emb = jnp.zeros((tile, ttab.shape[1]), jnp.float32)
    for v in range(ttab_ref.shape[0]):       # Vt is tiny (2 for BERT); unrolled
        type_emb = jnp.where(tids == v, ttab[v:v + 1, :], type_emb)

    # --- sum + LayerNorm (f32, statistics over the true hidden width) ----------
    x = wbuf[...] + pos_ref[...] + type_emb  # (tile, H_pad)
    h_pad = x.shape[-1]
    inv_h = 1.0 / hidden
    if hidden == h_pad:
        mean = jnp.sum(x, axis=-1, keepdims=True) * inv_h
        c = x - mean
    else:
        lane = lax.broadcasted_iota(jnp.int32, x.shape, 1)
        valid = lane < hidden
        mean = jnp.sum(jnp.where(valid, x, 0.0), axis=-1, keepdims=True) * inv_h
        c = jnp.where(valid, x - mean, 0.0)
    var = jnp.sum(c * c, axis=-1, keepdims=True) * inv_h
    y = c * lax.rsqrt(var + eps) * gamma_ref[...] + beta_ref[...]

    # TODO(synk): nn.Dropout omitted (identity in eval mode).
    out_ref[...] = y.astype(out_ref.dtype)


def bert_embeddings(input_ids, token_type_ids, position_ids,
                    word_table, pos_table, type_table, gamma, beta,
                    *, eps=1e-12, max_token_tile=512):
    """input_ids / token_type_ids: (B, S) int; position_ids: (S,) int."""
    B, S = input_ids.shape
    V, H = word_table.shape
    Vt = type_table.shape[0]

    H_pad = _round_up(H, 128)
    S_pad = _round_up(S, 8)
    tile = _pick_tile(S_pad, max_token_tile)
    if B * (S_pad // tile) < 2 and S_pad >= 16:
        tile = _pick_tile(S_pad, S_pad // 2)   # keep >= 2 grid blocks (v7x: 2 TCs)
    n_sb = S_pad // tile
    n_tiles = B * n_sb
    T_pad = B * S_pad

    def pad_h(a):
        return jnp.pad(a, ((0, 0), (0, H_pad - H))) if H_pad != H else a

    wtab = pad_h(word_table.astype(jnp.float32))          # stays HBM-resident
    ttab = pad_h(type_table.astype(jnp.float32))
    g = pad_h(jnp.asarray(gamma, jnp.float32).reshape(1, H))
    b = pad_h(jnp.asarray(beta, jnp.float32).reshape(1, H))

    # position rows in sequence order == position_embeddings(position_ids); the
    # batch expand is handled by the index_map reusing the same rows per sequence.
    pos_rows = pad_h(pos_table.astype(jnp.float32)[position_ids])
    if S_pad != S:
        pos_rows = jnp.pad(pos_rows, ((0, S_pad - S), (0, 0)))

    def pad_ids(ids):
        ids = ids.astype(jnp.int32)
        if S_pad != S:
            ids = jnp.pad(ids, ((0, 0), (0, S_pad - S)))   # padded tokens -> id 0
        return ids

    wid = pad_ids(input_ids).reshape(T_pad)                # scalar-prefetch ids (SMEM)
    tid = pad_ids(token_type_ids).reshape(T_pad, 1)

    kernel = functools.partial(_bert_embeddings_kernel, hidden=H, eps=eps)

    out = pl.pallas_call(
        kernel,
        out_shape=jax.ShapeDtypeStruct((T_pad, H_pad), jnp.float32),
        grid_spec=pltpu.PrefetchScalarGridSpec(
            num_scalar_prefetch=1,
            grid=(n_tiles,),
            in_specs=[
                pl.BlockSpec((tile, 1), lambda i, ids: (i, 0)),             # token-type ids
                pl.BlockSpec((tile, H_pad), lambda i, ids: (i % n_sb, 0)),  # position rows
                pl.BlockSpec((Vt, H_pad), lambda i, ids: (0, 0)),           # type table
                pl.BlockSpec((1, H_pad), lambda i, ids: (0, 0)),            # gamma
                pl.BlockSpec((1, H_pad), lambda i, ids: (0, 0)),            # beta
                pl.BlockSpec(memory_space=pl.ANY),                          # word table (HBM)
            ],
            out_specs=pl.BlockSpec((tile, H_pad), lambda i, ids: (i, 0)),
            scratch_shapes=[
                pltpu.VMEM((tile, H_pad), jnp.float32),
                pltpu.SemaphoreType.DMA((1,)),
            ],
        ),
        compiler_params=pltpu.CompilerParams(
            dimension_semantics=("parallel",)),
    )(wid, tid, pos_rows, ttab, g, b, wtab)

    return out.reshape(B, S_pad, H_pad)[:, :S, :H]


if __name__ == "__main__":
    # small config consistent with the module
    B, S, H = 2, 8, 32
    vocab_size = 64
    max_position_embeddings = 32
    type_vocab_size = 2

    key = jax.random.PRNGKey(0)
    k_w, k_p, k_t, k_ids, k_tt = jax.random.split(key, 5)

    # deterministic parameter init (BERT-style: N(0, 0.02), padding_idx=0 zeroed)
    word_table = 0.02 * jax.random.normal(k_w, (vocab_size, H), jnp.float32)
    word_table = word_table.at[0].set(0.0)   # padding_idx=0
    pos_table = 0.02 * jax.random.normal(k_p, (max_position_embeddings, H), jnp.float32)
    type_table = 0.02 * jax.random.normal(k_t, (type_vocab_size, H), jnp.float32)
    gamma = jnp.ones((H,), jnp.float32)      # LayerNorm weight
    beta = jnp.zeros((H,), jnp.float32)      # LayerNorm bias

    # example inputs
    input_ids = jax.random.randint(k_ids, (B, S), 0, vocab_size, dtype=jnp.int32)
    token_type_ids = jax.random.randint(k_tt, (B, S), 0, type_vocab_size, dtype=jnp.int32)
    position_ids = jnp.arange(S, dtype=jnp.int32)

    out = bert_embeddings(input_ids, token_type_ids, position_ids,
                          word_table, pos_table, type_table, gamma, beta)
    out = jax.block_until_ready(out)

    # reference check in plain JAX
    ref = (word_table[input_ids]
           + pos_table[jnp.broadcast_to(position_ids[None, :], (B, S))]
           + type_table[token_type_ids])
    mu = ref.mean(-1, keepdims=True)
    sig = ((ref - mu) ** 2).mean(-1, keepdims=True)
    ref = (ref - mu) / jnp.sqrt(sig + 1e-12) * gamma + beta

    assert out.shape == (B, S, H)
    assert jnp.allclose(out, ref, atol=1e-5), float(jnp.abs(out - ref).max())
    print("KERNEL_OK")
</pallas_src>

<mosaic_0001>
module attributes {stable_mosaic.version = 11 : i64} {
  func.func @_bert_embeddings_kernel(%arg0: i32, %arg1: memref<16xi32, #tpu.memory_space<smem>>, %arg2: memref<8x1xi32, #tpu.memory_space<vmem>>, %arg3: memref<8x128xf32, #tpu.memory_space<vmem>>, %arg4: memref<2x128xf32, #tpu.memory_space<vmem>>, %arg5: memref<1x128xf32, #tpu.memory_space<vmem>>, %arg6: memref<1x128xf32, #tpu.memory_space<vmem>>, %arg7: memref<64x128xf32, #tpu.memory_space<any>>, %arg8: memref<8x128xf32, #tpu.memory_space<vmem>>, %arg9: memref<8x128xf32, #tpu.memory_space<vmem>>, %arg10: memref<1x!tpu.dma_semaphore, #tpu.memory_space<semaphore_mem>>) attributes {dimension_semantics = [#tpu.dimension_semantics<parallel>], iteration_bounds = array<i64: 2>, scalar_prefetch = 1 : i64, scratch_operands = 2 : i64, tpu.core_type = #tpu.core_type<tc>, window_params = [{transform_indices = @transform_0, window_bounds = array<i64: 8, 1>}, {transform_indices = @transform_1, window_bounds = array<i64: 8, 128>}, {pipeline_mode = #tpu.pipeline_mode<synchronous>, transform_indices = @transform_2, window_bounds = array<i64: 2, 128>}, {pipeline_mode = #tpu.pipeline_mode<synchronous>, transform_indices = @transform_3, window_bounds = array<i64: 1, 128>}, {pipeline_mode = #tpu.pipeline_mode<synchronous>, transform_indices = @transform_4, window_bounds = array<i64: 1, 128>}, {}, {transform_indices = @transform_6, window_bounds = array<i64: 8, 128>}]} {
    %c8_i32 = arith.constant 8 : i32
    %0 = arith.muli %arg0, %c8_i32 : i32
    %c0_i32 = arith.constant 0 : i32
    %c8_i32_0 = arith.constant 8 : i32
    %1 = arith.addi %c0_i32, %c8_i32_0 : i32
    %c1_i32 = arith.constant 1 : i32
    scf.for %arg11 = %c0_i32 to %1 step %c1_i32  : i32 {
      %56 = arith.addi %0, %arg11 : i32
      %57 = arith.index_cast %56 : i32 to index
      %58 = memref.load %arg1[%57] : memref<16xi32, #tpu.memory_space<smem>>
      %c0_i32_28 = arith.constant 0 : i32
      %c0_i32_29 = arith.constant 0 : i32
      %59 = tpu.memref_slice %arg7[%58, %c0_i32_29] : memref<64x128xf32, #tpu.memory_space<any>> -> memref<1x128xf32, #tpu.memory_space<any>>
      %c0_i32_30 = arith.constant 0 : i32
      %60 = tpu.memref_slice %arg9[%arg11, %c0_i32_30] : memref<8x128xf32, #tpu.memory_space<vmem>> -> memref<1x128xf32, #tpu.memory_space<vmem>>
      %61 = tpu.memref_slice %arg10[%c0_i32_28] : memref<1x!tpu.dma_semaphore, #tpu.memory_space<semaphore_mem>> -> memref<1x!tpu.dma_semaphore, #tpu.memory_space<semaphore_mem>>
      %62 = tpu.memref_squeeze %61 : memref<1x!tpu.dma_semaphore, #tpu.memory_space<semaphore_mem>> -> memref<!tpu.dma_semaphore, #tpu.memory_space<semaphore_mem>>
      tpu.enqueue_dma source(%59 : memref<1x128xf32, #tpu.memory_space<any>>) target(%60 : memref<1x128xf32, #tpu.memory_space<vmem>>) target_semaphore(%62 : memref<!tpu.dma_semaphore, #tpu.memory_space<semaphore_mem>>)
    }
    %c8_i32_1 = arith.constant 8 : i32
    %c0_i32_2 = arith.constant 0 : i32
    %c8_i32_3 = arith.constant 8 : i32
    %2 = arith.addi %c0_i32_2, %c8_i32_3 : i32
    %c1_i32_4 = arith.constant 1 : i32
    scf.for %arg11 = %c0_i32_2 to %2 step %c1_i32_4  : i32 {
      %c0_i32_28 = arith.constant 0 : i32
      %c0_i32_29 = arith.constant 0 : i32
      %c0_i32_30 = arith.constant 0 : i32
      %56 = tpu.memref_slice %arg7[%c0_i32_29, %c0_i32_30] : memref<64x128xf32, #tpu.memory_space<any>> -> memref<1x128xf32, #tpu.memory_space<any>>
      %c0_i32_31 = arith.constant 0 : i32
      %57 = tpu.memref_slice %arg9[%arg11, %c0_i32_31] : memref<8x128xf32, #tpu.memory_space<vmem>> -> memref<1x128xf32, #tpu.memory_space<vmem>>
      %58 = tpu.memref_slice %arg10[%c0_i32_28] : memref<1x!tpu.dma_semaphore, #tpu.memory_space<semaphore_mem>> -> memref<1x!tpu.dma_semaphore, #tpu.memory_space<semaphore_mem>>
      %59 = tpu.memref_squeeze %58 : memref<1x!tpu.dma_semaphore, #tpu.memory_space<semaphore_mem>> -> memref<!tpu.dma_semaphore, #tpu.memory_space<semaphore_mem>>
      tpu.wait_dma2 semaphore(%59 : memref<!tpu.dma_semaphore, #tpu.memory_space<semaphore_mem>>) src(%56 : memref<1x128xf32, #tpu.memory_space<any>>) dst(%57 : memref<1x128xf32, #tpu.memory_space<vmem>>)
    }
    %c8_i32_5 = arith.constant 8 : i32
    %c0 = arith.constant 0 : index
    %c0_6 = arith.constant 0 : index
    %3 = vector.load %arg2[%c0, %c0_6] : memref<8x1xi32, #tpu.memory_space<vmem>>, vector<8x1xi32>
    %c0_7 = arith.constant 0 : index
    %c0_8 = arith.constant 0 : index
    %4 = vector.load %arg4[%c0_7, %c0_8] : memref<2x128xf32, #tpu.memory_space<vmem>>, vector<2x128xf32>
    %cst = arith.constant 0.000000e+00 : f32
    %5 = vector.broadcast %cst : f32 to vector<8x128xf32>
    %c0_i32_9 = arith.constant 0 : i32
    %6 = vector.broadcast %c0_i32_9 : i32 to vector<8x1xi32>
    %7 = arith.cmpi eq, %3, %6 : vector<8x1xi32>
    %8 = vector.extract_strided_slice %4 {offsets = [0, 0], sizes = [1, 128], strides = [1, 1]} : vector<2x128xf32> to vector<1x128xf32>
    %9 = vector.shape_cast %7 : vector<8x1xi1> to vector<8x1xi1>
    %10 = vector.broadcast %9 : vector<8x1xi1> to vector<8x128xi1>
    %11 = vector.shape_cast %8 : vector<1x128xf32> to vector<1x128xf32>
    %12 = vector.broadcast %11 : vector<1x128xf32> to vector<8x128xf32>
    %13 = arith.select %10, %12, %5 : vector<8x128xi1>, vector<8x128xf32>
    %c1_i32_10 = arith.constant 1 : i32
    %14 = vector.broadcast %c1_i32_10 : i32 to vector<8x1xi32>
    %15 = arith.cmpi eq, %3, %14 : vector<8x1xi32>
    %16 = vector.extract_strided_slice %4 {offsets = [1, 0], sizes = [1, 128], strides = [1, 1]} : vector<2x128xf32> to vector<1x128xf32>
    %17 = vector.shape_cast %15 : vector<8x1xi1> to vector<8x1xi1>
    %18 = vector.broadcast %17 : vector<8x1xi1> to vector<8x128xi1>
    %19 = vector.shape_cast %16 : vector<1x128xf32> to vector<1x128xf32>
    %20 = vector.broadcast %19 : vector<1x128xf32> to vector<8x128xf32>
    %21 = arith.select %18, %20, %13 : vector<8x128xi1>, vector<8x128xf32>
    %c0_11 = arith.constant 0 : index
    %c0_12 = arith.constant 0 : index
    %22 = vector.load %arg9[%c0_11, %c0_12] : memref<8x128xf32, #tpu.memory_space<vmem>>, vector<8x128xf32>
    %c0_13 = arith.constant 0 : index
    %c0_14 = arith.constant 0 : index
    %23 = vector.load %arg3[%c0_13, %c0_14] : memref<8x128xf32, #tpu.memory_space<vmem>>, vector<8x128xf32>
    %24 = arith.addf %22, %23 : vector<8x128xf32>
    %25 = arith.addf %24, %21 : vector<8x128xf32>
    %26 = tpu.iota {dimensions = array<i32: 1>} : vector<8x128xi32>
    %c32_i32 = arith.constant 32 : i32
    %27 = vector.broadcast %c32_i32 : i32 to vector<8x128xi32>
    %28 = arith.cmpi slt, %26, %27 : vector<8x128xi32>
    %cst_15 = arith.constant 0.000000e+00 : f32
    %29 = vector.broadcast %cst_15 : f32 to vector<8x128xf32>
    %30 = arith.select %28, %25, %29 : vector<8x128xi1>, vector<8x128xf32>
    %cst_16 = arith.constant dense<0.000000e+00> : vector<8xf32>
    %31 = vector.multi_reduction <add>, %30, %cst_16 [1] : vector<8x128xf32> to vector<8xf32>
    %32 = vector.shape_cast %31 : vector<8xf32> to vector<8x1xf32>
    %cst_17 = arith.constant 3.125000e-02 : f32
    %33 = vector.broadcast %cst_17 : f32 to vector<8x1xf32>
    %34 = arith.mulf %32, %33 : vector<8x1xf32>
    %35 = vector.broadcast %34 : vector<8x1xf32> to vector<8x128xf32>
    %36 = arith.subf %25, %35 : vector<8x128xf32>
    %cst_18 = arith.constant 0.000000e+00 : f32
    %37 = vector.broadcast %cst_18 : f32 to vector<8x128xf32>
    %38 = arith.select %28, %36, %37 : vector<8x128xi1>, vector<8x128xf32>
    %39 = arith.mulf %38, %38 : vector<8x128xf32>
    %cst_19 = arith.constant dense<0.000000e+00> : vector<8xf32>
    %40 = vector.multi_reduction <add>, %39, %cst_19 [1] : vector<8x128xf32> to vector<8xf32>
    %41 = vector.shape_cast %40 : vector<8xf32> to vector<8x1xf32>
    %cst_20 = arith.constant 3.125000e-02 : f32
    %42 = vector.broadcast %cst_20 : f32 to vector<8x1xf32>
    %43 = arith.mulf %41, %42 : vector<8x1xf32>
    %cst_21 = arith.constant 9.99999996E-13 : f32
    %44 = vector.broadcast %cst_21 : f32 to vector<8x1xf32>
    %45 = arith.addf %43, %44 : vector<8x1xf32>
    %46 = math.rsqrt %45 : vector<8x1xf32>
    %47 = vector.broadcast %46 : vector<8x1xf32> to vector<8x128xf32>
    %48 = arith.mulf %38, %47 : vector<8x128xf32>
    %c0_22 = arith.constant 0 : index
    %c0_23 = arith.constant 0 : index
    %49 = vector.load %arg5[%c0_22, %c0_23] : memref<1x128xf32, #tpu.memory_space<vmem>>, vector<1x128xf32>
    %50 = vector.broadcast %49 : vector<1x128xf32> to vector<8x128xf32>
    %51 = arith.mulf %48, %50 : vector<8x128xf32>
    %c0_24 = arith.constant 0 : index
    %c0_25 = arith.constant 0 : index
    %52 = vector.load %arg6[%c0_24, %c0_25] : memref<1x128xf32, #tpu.memory_space<vmem>>, vector<1x128xf32>
    %53 = vector.broadcast %52 : vector<1x128xf32> to vector<8x128xf32>
    %54 = arith.addf %51, %53 : vector<8x128xf32>
    %c0_26 = arith.constant 0 : index
    %c0_27 = arith.constant 0 : index
    %55 = vector.load %arg8[%c0_26, %c0_27] : memref<8x128xf32, #tpu.memory_space<vmem>>, vector<8x128xf32>
    tpu.vector_store %arg8[%c0_26, %c0_27], %54 {strides = array<i32>} : memref<8x128xf32, #tpu.memory_space<vmem>>, vector<8x128xf32>,
    return
  }
  func.func @transform_0(%arg0: i32, %arg1: memref<16xi32, #tpu.memory_space<smem>>) -> (i32, i32) {
    %c0_i32 = arith.constant 0 : i32
    %c0_i32_0 = arith.constant 0 : i32
    return %arg0, %c0_i32 : i32, i32
  }
  func.func @transform_1(%arg0: i32, %arg1: memref<16xi32, #tpu.memory_space<smem>>) -> (i32, i32) {
    %c1_i32 = arith.constant 1 : i32
    %c0_i32 = arith.constant 0 : i32
    %0 = arith.cmpi eq, %c1_i32, %c0_i32 : i32
    %c1_i32_0 = arith.constant 1 : i32
    %1 = arith.select %0, %c1_i32_0, %c1_i32 : i32
    %2 = arith.remsi %arg0, %1 : i32
    %c0_i32_1 = arith.constant 0 : i32
    %3 = arith.cmpi ne, %2, %c0_i32_1 : i32
    %c0_i32_2 = arith.constant 0 : i32
    %4 = arith.cmpi slt, %2, %c0_i32_2 : i32
    %c0_i32_3 = arith.constant 0 : i32
    %5 = arith.cmpi slt, %1, %c0_i32_3 : i32
    %6 = arith.xori %4, %5 : i1
    %7 = arith.andi %6, %3 : i1
    %8 = arith.addi %2, %1 : i32
    %9 = arith.select %7, %8, %2 : i32
    %c0_i32_4 = arith.constant 0 : i32
    %c0_i32_5 = arith.constant 0 : i32
    return %9, %c0_i32_4 : i32, i32
  }
  func.func @transform_2(%arg0: i32, %arg1: memref<16xi32, #tpu.memory_space<smem>>) -> (i32, i32) {
    %c0_i32 = arith.constant 0 : i32
    %c0_i32_0 = arith.constant 0 : i32
    %c0_i32_1 = arith.constant 0 : i32
    return %c0_i32, %c0_i32_0 : i32, i32
  }
  func.func @transform_3(%arg0: i32, %arg1: memref<16xi32, #tpu.memory_space<smem>>) -> (i32, i32) {
    %c0_i32 = arith.constant 0 : i32
    %c0_i32_0 = arith.constant 0 : i32
    %c0_i32_1 = arith.constant 0 : i32
    return %c0_i32, %c0_i32_0 : i32, i32
  }
  func.func @transform_4(%arg0: i32, %arg1: memref<16xi32, #tpu.memory_space<smem>>) -> (i32, i32) {
    %c0_i32 = arith.constant 0 : i32
    %c0_i32_0 = arith.constant 0 : i32
    %c0_i32_1 = arith.constant 0 : i32
    return %c0_i32, %c0_i32_0 : i32, i32
  }
  func.func @transform_6(%arg0: i32, %arg1: memref<16xi32, #tpu.memory_space<smem>>) -> (i32, i32) {
    %c0_i32 = arith.constant 0 : i32
    %c0_i32_0 = arith.constant 0 : i32
    return %arg0, %c0_i32 : i32, i32
  }
}

</mosaic_0001>

<llo_original>
// kernel: tpu_custom_call.1
$region0: #{tpu_custom_call.1}
  #allocation0 [shape = 'u32[]', space=smem, size = 0x4, offset = 0x4, fixed_abs, tag = 'smem constant byte address 0x4 - core index']
  #allocation1 [shape = 'u32[144,128]{1,0:T(1,128)}', space=vmem, size = 0x12000, scoped, tag = 'internal scratch']
  #allocation2 [shape = 'f32[8,128]{1,0:T(8,128)}', space=vmem, size = 0x1000, scoped, tag = 'scratch operand']
  #allocation3 [shape = 's32[1]{0}', space=sflag, size = 0x4, scoped, tag = 'scratch operand']
  #allocation4 [shape = 's32[1]{0}', space=sflag, size = 0x4, scoped, tag = 'scoped memory for tpu_custom_call.1']
  #allocation5 [shape = 'u8[512]{0}', space=smem, size = 0x200, scoped, tag = 'prefetched SMEM operand 0']
  #allocation8 [shape = 's32[]', space=sflag, size = 0x4, offset = 0, fixed_abs, tag = 'sflag constant byte address 0x0 - dummy sync flag']
  #allocation9 [shape = 's32[]', space=sflag, size = 0x4, offset = 0, fixed_abs, tag = 'sflag constant byte address 0x0 - dummy sync flag']
  #allocation10 [shape = 'u32[]', space=smem, size = 0x4, offset = 0x44, fixed_abs, tag = 'smem constant byte address 0x44 - assertion arg 0']
  #allocation11 [shape = 'u32[]', space=smem, size = 0x4, offset = 0x48, fixed_abs, tag = 'smem constant byte address 0x48 - assertion arg 1']
  %s0 = inlined_call_operand.vmem [shape: s32[16], index: 0, kind: input, shape index: {}]
  %s1 = inlined_call_operand.vmem [shape: s32[16,1], index: 1, kind: input, shape index: {}]
  %s2 = inlined_call_operand.vmem [shape: f32[8,128], index: 2, kind: input, shape index: {}]
  %s3 = inlined_call_operand.vmem [shape: f32[2,128], index: 3, kind: input, shape index: {}]
  %s4 = inlined_call_operand.vmem [shape: f32[1,128], index: 4, kind: input, shape index: {}]
  %s5 = inlined_call_operand.vmem [shape: f32[1,128], index: 5, kind: input, shape index: {}]
  %s6 = inlined_call_operand.hbm [shape: f32[64,128], index: 6, kind: input, shape index: {}]
  %s7 = inlined_call_operand.hbm [shape: f32[16,128], index: 7, kind: output, shape index: {}]
  %s8 = sld [smem:[#allocation0]]
  $region71: #{tpu_custom_call.1} parent=0
    _
  %s10 = ssub.s32 1, %s8
  %s11 = scalar_select 0, %s10, %s8
  %s12 = sshll.u32 %s0, 4
  %s13 = int_to_ptr.vmem [resolvable:$true] %s12
  %15 = dma.vmem_to_smem %s13, 16, [#allocation5], [#allocation4]
  %16 = dma.done [#allocation4], 16
  %17 = sfence
  $region1: #{tpu_custom_call.1} parent=0
    #allocation6 [shape = 'u8[8192]{0}', space=vmem, size = 0x2000, scoped, tag = 'output window, operand 0']
    #allocation7 [shape = 's32[2]{0}', space=sflag, size = 0x8, scoped, tag = 'scoped memory for tpu_custom_call.1']
    %18 = vsyncpa [#allocation7], 0
    %s19 = scalar_lea.sflag [#allocation7], 1
    %20 = vsyncpa %s19, 0
    loop: start=0, step=1, limit=4
    $region2: #{tpu_custom_call.1} parent=1 // loop_pre_header
      _
    $region3: #{tpu_custom_call.1} parent=1 // loop_header
      %s22 = sphi 0, %s26
      %p23 = scmp.ge.s32.totalorder %s22, 4
      %s32 = sphi 0, %s34
      %s35 = sphi 0, %s32
      %s36 = sphi 0, %s35
      %s52 = sphi 0, %s36
      %s56 = sphi 0, %s56
      %s58 = sphi 0, %s56
      %s59 = sphi 0, %s58
      %s73 = sphi 0, %s59
      %s77 = sphi 0, %s77
      %s79 = sphi 0, %s77
      %s80 = sphi 0, %s79
      %s94 = sphi 0, %s80
      %s98 = sphi 0, %s98
      %s100 = sphi 0, %s98
      %s101 = sphi 0, %s100
      %s115 = sphi 0, %s101
      %s119 = sphi 0, %s119
      %s121 = sphi 0, %s119
      %s122 = sphi 0, %s121
      %s136 = sphi 0, %s122
      %s142 = sphi 0, %s144
      %s145 = sphi 0, %s142
      %s146 = sphi 0, %s145
      %s162 = sphi 0, %s146
    $region4: #{tpu_custom_call.1} parent=1 // loop_header_branch
      %25 = sbr.rel (%p23) target = $region8
    $region5: #{tpu_custom_call.1} parent=1 // loop_body
      %s27 = ssub.s32 %s22, 1
      %s28 = ssub.s32 %s22, 2
      %s29 = sadd.s32 %s22, 1
      %s30 = ssub.s32 %s22, %s29
      %p31 = scmp.eq.s32.totalorder %s30, 0
      %s33 = sadd.s32 %s32, 1
      %s34 = scalar_select %p31, %s32, %s33
      %p37 = pneg %p31
      %p38 = scmp.eq.s32.totalorder %s22, 1
      %p39 = por %p37, %p38
      %p40 = scmp.ne.s32.totalorder %s32, %s35
      %p41 = scmp.eq.s32.totalorder %s22, 0
      %p42 = por %p40, %p41
      %p43 = scmp.ne.s32.totalorder %s32, %s35
      %p44 = scmp.eq.s32.totalorder %s27, 1
      %p45 = por %p43, %p44
      %p46 = scmp.ne.s32.totalorder %s35, %s36
      %p47 = scmp.eq.s32.totalorder %s27, 0
      %p48 = por %p46, %p47
      %p49 = scmp.ne.s32.totalorder %s35, %s36
      %p50 = scmp.eq.s32.totalorder %s28, 1
      %p51 = por %p49, %p50
      %p53 = scmp.ne.s32.totalorder %s36, %s52
      %p54 = scmp.eq.s32.totalorder %s28, 0
      %p55 = por %p53, %p54
      %s57 = sadd.s32 %s56, 1
      %p60 = scmp.eq.s32.totalorder %s22, 1
      %p61 = scmp.ne.s32.totalorder %s56, %s58
      %p62 = scmp.eq.s32.totalorder %s22, 0
      %p63 = por %p61, %p62
      %p64 = scmp.ne.s32.totalorder %s56, %s58
      %p65 = scmp.eq.s32.totalorder %s27, 1
      %p66 = por %p64, %p65
      %p67 = scmp.ne.s32.totalorder %s58, %s59
      %p68 = scmp.eq.s32.totalorder %s27, 0
      %p69 = por %p67, %p68
      %p70 = scmp.ne.s32.totalorder %s58, %s59
      %p71 = scmp.eq.s32.totalorder %s28, 1
      %p72 = por %p70, %p71
      %p74 = scmp.ne.s32.totalorder %s59, %s73
      %p75 = scmp.eq.s32.totalorder %s28, 0
      %p76 = por %p74, %p75
      %s78 = sadd.s32 %s77, 1
      %p81 = scmp.eq.s32.totalorder %s22, 1
      %p82 = scmp.ne.s32.totalorder %s77, %s79
      %p83 = scmp.eq.s32.totalorder %s22, 0
      %p84 = por %p82, %p83
      %p85 = scmp.ne.s32.totalorder %s77, %s79
      %p86 = scmp.eq.s32.totalorder %s27, 1
      %p87 = por %p85, %p86
      %p88 = scmp.ne.s32.totalorder %s79, %s80
      %p89 = scmp.eq.s32.totalorder %s27, 0
      %p90 = por %p88, %p89
      %p91 = scmp.ne.s32.totalorder %s79, %s80
      %p92 = scmp.eq.s32.totalorder %s28, 1
      %p93 = por %p91, %p92
      %p95 = scmp.ne.s32.totalorder %s80, %s94
      %p96 = scmp.eq.s32.totalorder %s28, 0
      %p97 = por %p95, %p96
      %s99 = sadd.s32 %s98, 1
      %p102 = scmp.eq.s32.totalorder %s22, 1
      %p103 = scmp.ne.s32.totalorder %s98, %s100
      %p104 = scmp.eq.s32.totalorder %s22, 0
      %p105 = por %p103, %p104
      %p106 = scmp.ne.s32.totalorder %s98, %s100
      %p107 = scmp.eq.s32.totalorder %s27, 1
      %p108 = por %p106, %p107
      %p109 = scmp.ne.s32.totalorder %s100, %s101
      %p110 = scmp.eq.s32.totalorder %s27, 0
      %p111 = por %p109, %p110
      %p112 = scmp.ne.s32.totalorder %s100, %s101
      %p113 = scmp.eq.s32.totalorder %s28, 1
      %p114 = por %p112, %p113
      %p116 = scmp.ne.s32.totalorder %s101, %s115
      %p117 = scmp.eq.s32.totalorder %s28, 0
      %p118 = por %p116, %p117
      %s120 = sadd.s32 %s119, 1
      %p123 = scmp.eq.s32.totalorder %s22, 1
      %p124 = scmp.ne.s32.totalorder %s119, %s121
      %p125 = scmp.eq.s32.totalorder %s22, 0
      %p126 = por %p124, %p125
      %p127 = scmp.ne.s32.totalorder %s119, %s121
      %p128 = scmp.eq.s32.totalorder %s27, 1
      %p129 = por %p127, %p128
      %p130 = scmp.ne.s32.totalorder %s121, %s122
      %p131 = scmp.eq.s32.totalorder %s27, 0
      %p132 = por %p130, %p131
      %p133 = scmp.ne.s32.totalorder %s121, %s122
      %p134 = scmp.eq.s32.totalorder %s28, 1
      %p135 = por %p133, %p134
      %p137 = scmp.ne.s32.totalorder %s122, %s136
      %p138 = scmp.eq.s32.totalorder %s28, 0
      %p139 = por %p137, %p138
      %s140 = ssub.s32 %s22, %s29
      %p141 = scmp.eq.s32.totalorder %s140, 0
      %s143 = sadd.s32 %s142, 1
      %s144 = scalar_select %p141, %s142, %s143
      %p147 = pneg %p141
      %p148 = scmp.eq.s32.totalorder %s22, 1
      %p149 = por %p147, %p148
      %p150 = scmp.ne.s32.totalorder %s142, %s145
      %p151 = scmp.eq.s32.totalorder %s22, 0
      %p152 = por %p150, %p151
      %p153 = scmp.ne.s32.totalorder %s142, %s145
      %p154 = scmp.eq.s32.totalorder %s27, 1
      %p155 = por %p153, %p154
      %p156 = scmp.ne.s32.totalorder %s145, %s146
      %p157 = scmp.eq.s32.totalorder %s27, 0
      %p158 = por %p156, %p157
      %p159 = scmp.ne.s32.totalorder %s145, %s146
      %p160 = scmp.eq.s32.totalorder %s28, 1
      %p161 = por %p159, %p160
      %p163 = scmp.ne.s32.totalorder %s146, %s162
      %p164 = scmp.eq.s32.totalorder %s28, 0
      %p165 = por %p163, %p164
      %p166 = scmp.le.s32.totalorder 1, %s22
      %p167 = scmp.lt.s32.totalorder %s22, 3
      %p168 = pnand %p166, %p167
      %p169 = pneg %p168
      // Predicated region
      $region9: #{tpu_custom_call.1} parent=5 // pred_check
        _
      $region10: #{tpu_custom_call.1} parent=5 // pred_check_branch
        %171 = sbr.rel (%p168) target = $region12
      $region11: #{tpu_custom_call.1} parent=5 // pred_region
        %s172 = ssub.s32 %s22, 1
        // Predicated region
        $region13: #{tpu_custom_call.1} parent=11 // pred_check
          %p173 = pneg %p69
        $region14: #{tpu_custom_call.1} parent=11 // pred_check_branch
          %175 = sbr.rel (%p173) target = $region16
        $region15: #{tpu_custom_call.1} parent=11 // pred_region
          _
        $region16: #{tpu_custom_call.1} parent=11 // pred_fallthru
          _
        // Predicated region
        $region17: #{tpu_custom_call.1} parent=11 // pred_check
          %p176 = pneg %p90
        $region18: #{tpu_custom_call.1} parent=11 // pred_check_branch
          %178 = sbr.rel (%p176) target = $region20
        $region19: #{tpu_custom_call.1} parent=11 // pred_region
          _
        $region20: #{tpu_custom_call.1} parent=11 // pred_fallthru
          _
        // Predicated region
        $region21: #{tpu_custom_call.1} parent=11 // pred_check
          %p179 = pneg %p111
        $region22: #{tpu_custom_call.1} parent=11 // pred_check_branch
          %181 = sbr.rel (%p179) target = $region24
        $region23: #{tpu_custom_call.1} parent=11 // pred_region
          _
        $region24: #{tpu_custom_call.1} parent=11 // pred_fallthru
          _
        // Predicated region
        $region25: #{tpu_custom_call.1} parent=11 // pred_check
          %p182 = pneg %p132
        $region26: #{tpu_custom_call.1} parent=11 // pred_check_branch
          %184 = sbr.rel (%p182) target = $region28
        $region27: #{tpu_custom_call.1} parent=11 // pred_region
          _
        $region28: #{tpu_custom_call.1} parent=11 // pred_fallthru
          _
      $region12: #{tpu_custom_call.1} parent=5 // pred_fallthru
        _
      %p185 = scmp.lt.s32.totalorder %s22, 2
      // Predicated region
      $region29: #{tpu_custom_call.1} parent=5 // pred_check
        %p186 = pneg %p185
      $region30: #{tpu_custom_call.1} parent=5 // pred_check_branch
        %188 = sbr.rel (%p186) target = $region32
      $region31: #{tpu_custom_call.1} parent=5 // pred_region
        // Predicated region
        $region33: #{tpu_custom_call.1} parent=31 // pred_check
          %p189 = pneg %p42
        $region34: #{tpu_custom_call.1} parent=31 // pred_check_branch
          %191 = sbr.rel (%p189) target = $region36
        $region35: #{tpu_custom_call.1} parent=31 // pred_region
          %p192 = scmp.lt.s32.totalorder %s22, 1
          %s193 = scalar_select %p192, %s22, 1
          %s194 = smul.addr %s193, 8
          %s195 = scalar_lea.vmem %s1, %s194
        $region36: #{tpu_custom_call.1} parent=31 // pred_fallthru
          _
      $region32: #{tpu_custom_call.1} parent=5 // pred_fallthru
        _
      %p196 = scmp.le.s32.totalorder 1, %s22
      %p197 = scmp.lt.s32.totalorder %s22, 3
      %p198 = pnand %p196, %p197
      %p199 = pneg %p198
      // Predicated region
      $region37: #{tpu_custom_call.1} parent=5 // pred_check
        _
      $region38: #{tpu_custom_call.1} parent=5 // pred_check_branch
        %201 = sbr.rel (%p198) target = $region40
      $region39: #{tpu_custom_call.1} parent=5 // pred_region
        %s202 = ssub.s32 %s22, 1
        %p203 = scmp.lt.s32.totalorder %s27, 1
        %s204 = scalar_select %p203, %s27, 1
        %s205 = smul.addr %s204, 8
        %s206 = scalar_lea.vmem %s1, %s205
        %p207 = pneg %p48
        %p208 = pneg %p45
        %p209 = pneg %p69
        %p210 = pneg %p66
        %p211 = pneg %p90
        %p212 = pneg %p87
        %p213 = pneg %p111
        %p214 = pneg %p108
        %p215 = pneg %p132
        %p216 = pneg %p129
        %p217 = pneg %p158
        %p218 = pneg %p155
        %s219 = sand.u32 %s145, 1
        %s220 = scalar_lea.sflag [#allocation7], %s219
        %s221 = sand.u32 %s145, 1
        %s222 = smul.addr %s221, 8
        %s223 = scalar_lea.vmem [#allocation6], %s222
        %p224 = scmp.lt.s32.totalorder %s27, 1
        %s225 = scalar_select %p224, %s27, 1
        %s226 = smul.addr %s225, 8
        %s227 = scalar_lea.vmem %s1, %s226
        %s228 = smul.u32 %s27, 8
        loop: start=0, step=1, limit=8
        $region41: #{tpu_custom_call.1} parent=39 // loop_pre_header
          _
        $region42: #{tpu_custom_call.1} parent=39 // loop_header
          %s230 = sphi 0, %s234
          %p231 = scmp.ge.s32.totalorder %s230, 8
        $region43: #{tpu_custom_call.1} parent=39 // loop_header_branch
          %233 = sbr.rel (%p231) target = $region47
        $region44: #{tpu_custom_call.1} parent=39 // loop_body
          %s235 = sadd.s32 %s228, %s230
          %s236 = sld [smem:[#allocation5 + %s235]]
          %s237 = smul.addr %s236, 16
          %s238 = scalar_lea.hbm %s6, %s237
          %s239 = scalar_lea.vmem [#allocation2], %s230
          // Predicated region
          $region48: #{tpu_custom_call.1} parent=44 // pred_check
            _
          $region49: #{tpu_custom_call.1} parent=44 // pred_check_branch
            %241 = sbr.rel target = $region51
          $region50: #{tpu_custom_call.1} parent=44 // pred_region
            %242 = sst [smem:[#allocation10]] [#allocation9]
            %243 = sst [smem:[#allocation11]] [#allocation8]
          $region51: #{tpu_custom_call.1} parent=44 // pred_fallthru
            _
          %245 = shalt.err (0)
          %s247 = sshll.u32 %s239, 4
          %s248 = int_to_ptr.vmem [resolvable:$true] %s247
          %250 = dma.hbm_to_vmem [thread:$0]  %s238, 16, %s248, [#allocation3]
        $region45: #{tpu_custom_call.1} parent=39 // loop_footer
          %s234 = sadd.s32 1, %s230
        $region46: #{tpu_custom_call.1} parent=39 // loop_footer_branch
          %229 = sbr.rel target = $region42
        $region47: #{tpu_custom_call.1} parent=39 // loop_exit
          _
        loop: start=0, step=1, limit=8
        $region52: #{tpu_custom_call.1} parent=39 // loop_pre_header
          _
        $region53: #{tpu_custom_call.1} parent=39 // loop_header
          %s252 = sphi 0, %s256
          %p253 = scmp.ge.s32.totalorder %s252, 8
        $region54: #{tpu_custom_call.1} parent=39 // loop_header_branch
          %255 = sbr.rel (%p253) target = $region58
        $region55: #{tpu_custom_call.1} parent=39 // loop_body
          %s257 = smul.u32 1, 1
          %s258 = sshll.u32 %s257, 4
          %259 = dma.done [#allocation3], %s258
        $region56: #{tpu_custom_call.1} parent=39 // loop_footer
          %s256 = sadd.s32 1, %s252
        $region57: #{tpu_custom_call.1} parent=39 // loop_footer_branch
          %251 = sbr.rel target = $region53
        $region58: #{tpu_custom_call.1} parent=39 // loop_exit
          _
        %v260 = vld [vmem:[%s227] sm:$0xff]
        %v261 = vld [vmem:[%s3] sm:$0x3]
        %vm262 = vcmp.eq.s32.totalorder %v260, 0
        %v263 = vsel %vm262, 1, 0
        %264 = vset.pattern.permute.xlu0 0
        %265 = vperm.xlu0 %264, %v263
        %v266 = vpop.permute.xlu0 %265
        %vm267 = vcmp.eq.s32.totalorder %v266, 1
        %v268 = vlaneseq
        %v269 = vshrl.u32 %v268, 7
        %v270 = vsub.s32 0, %v269
        %v271 = vrot.slane %v261, %v270
        %v272 = vsel %vm267, %v271, 0.0
        %vm273 = vcmp.eq.s32.totalorder %v260, 1
        %v274 = vsel %vm273, 1, 0
        %275 = vset.pattern.permute.xlu0 0
        %276 = vperm.xlu0 %275, %v274
        %v277 = vpop.permute.xlu0 %276
        %vm278 = vcmp.eq.s32.totalorder %v277, 1
        %v279 = vlaneseq
        %v280 = vshrl.u32 %v279, 7
        %v281 = vsub.s32 1, %v280
        %v282 = vrot.slane %v261, %v281
        %v283 = vsel %vm278, %v282, %v272
        %v284 = vld [vmem:[#allocation2] sm:$0xff]
        %v285 = vld [vmem:[%s2] sm:$0xff]
        %v286 = vadd.f32 %v284, %v285
        %v287 = vadd.f32 %v286, %v283
        %v288 = vlaneseq
        %v289 = vand.u32 %v288, 127
        %vm290 = vcmp.lt.s32.totalorder %v289, 32
        %v291 = vsel %vm290, %v287, 0.0
        %292 = vadd.xlane.f32.xlu0 %v291
        %v293 = vpop.xlane.xlu0 %292
        %v294 = vmul.f32 %v293, 0.03125
        %v295 = vsub.f32 %v287, %v294
        %v296 = vsel %vm290, %v295, 0.0
        %v297 = vmul.f32 %v296, %v296
        %298 = vadd.xlane.f32.xlu0 %v297
        %v299 = vpop.xlane.xlu0 %298
        %v300 = vmul.f32 %v299, 0.03125
        %v301 = vadd.f32 %v300, 1e-12
        %v302 = vrsqrt.pop %v301
        %v303 = vmul.f32 %v296, %v302
        %v304 = vld [vmem:[%s4] sm:$0x1]
        %v306 = vlaneseq
        %v307 = vshrl.u32 %v306, 7
        %v308 = vsub.s32 0, %v307
        %v309 = vrot.slane %v304, %v308
        %v311 = vmul.f32 %v303, %v309
        %v312 = vld [vmem:[%s5] sm:$0x1]
        %v314 = vlaneseq
        %v315 = vshrl.u32 %v314, 7
        %v316 = vsub.s32 0, %v315
        %v317 = vrot.slane %v312, %v316
        %v319 = vadd.f32 %v311, %v317
        %320 = vst [vmem:[%s223] sm:$0xff] %v319
        %s321 = sand.u32 %s145, 1
        %s322 = scalar_lea.sflag [#allocation7], %s321
        %s323 = sand.u32 %s145, 1
        %s324 = smul.addr %s323, 8
        %s325 = scalar_lea.vmem [#allocation6], %s324
        // Predicated region
        $region59: #{tpu_custom_call.1} parent=39 // pred_check
          %p326 = pneg %p155
        $region60: #{tpu_custom_call.1} parent=39 // pred_check_branch
          %328 = sbr.rel (%p326) target = $region62
        $region61: #{tpu_custom_call.1} parent=39 // pred_region
          %s330 = ssub.s32 128, 128
          %331 = vsyncadd %s322, %s330
          %s332 = smul.addr %s27, 128
          %s333 = scalar_lea.hbm %s7, %s332
          %s335 = sshll.u32 %s325, 4
          %s336 = int_to_ptr.vmem [resolvable:$true] %s335
          %338 = dma.vmem_to_hbm [thread:$0]  %s336, 128, %s333, %s322
        $region62: #{tpu_custom_call.1} parent=39 // pred_fallthru
          _
      $region40: #{tpu_custom_call.1} parent=5 // pred_fallthru
        _
      %p339 = scmp.le.s32.totalorder 2, %s22
      // Predicated region
      $region63: #{tpu_custom_call.1} parent=5 // pred_check
        %p340 = pneg %p339
      $region64: #{tpu_custom_call.1} parent=5 // pred_check_branch
        %342 = sbr.rel (%p340) target = $region66
      $region65: #{tpu_custom_call.1} parent=5 // pred_region
        %s343 = ssub.s32 %s22, 2
        // Predicated region
        $region67: #{tpu_custom_call.1} parent=65 // pred_check
          %p344 = pneg %p161
        $region68: #{tpu_custom_call.1} parent=65 // pred_check_branch
          %346 = sbr.rel (%p344) target = $region70
        $region69: #{tpu_custom_call.1} parent=65 // pred_region
          %s347 = sand.u32 %s146, 1
          %s348 = scalar_lea.sflag [#allocation7], %s347
          %s349 = sand.u32 %s146, 1
          %s350 = smul.addr %s349, 8
          %s351 = scalar_lea.vmem [#allocation6], %s350
          %352 = dma.done %s348, 128
        $region70: #{tpu_custom_call.1} parent=65 // pred_fallthru
          _
      $region66: #{tpu_custom_call.1} parent=5 // pred_fallthru
        _
    $region6: #{tpu_custom_call.1} parent=1 // loop_footer
      %s26 = sadd.s32 1, %s22
    $region7: #{tpu_custom_call.1} parent=1 // loop_footer_branch
      %21 = sbr.rel target = $region3
    $region8: #{tpu_custom_call.1} parent=1 // loop_exit
      _
    %353 = vsyncpa [#allocation7], 1
    %s354 = scalar_lea.sflag [#allocation7], 1
    %355 = vsyncpa %s354, 1
  %356 = vsyncmov [#allocation3]
  %s357 = vpop.sfrf %356
  %p358 = scmp.eq.s32.totalorder %s357, 0
  %p359 = pneg %p358
  %361 = shalt.err (%p359)

</llo_original>
